<compile_context>
chip_gen: v7x
topology: tpu7x:2x2x1
jax: 0.10.0
libtpu: 0.0.40
codegen_flags: <defaults>
</compile_context>

<pallas_src>
from functools import partial

import jax
import jax.numpy as jnp
from jax.experimental import pallas as pl
from jax.experimental.pallas import tpu as pltpu


_LANES = 128
_CHUNK = 512                    # rows per in-kernel accumulation step
_TARGET_STEP_BYTES = 8 << 20    # combined native-dtype bytes DMA'd per grid step


def _num_tensorcores():
    """TensorCores per chip a 'parallel' grid axis can shard over (perf-only)."""
    try:
        dev = jax.devices()[0]
        nc = getattr(dev, "num_cores", None)
        if isinstance(nc, int) and nc > 0:
            return max(1, min(int(nc), 2))
        kind = str(getattr(dev, "device_kind", "")).lower()
        if "v7" in kind:
            return 2
    except Exception:
        pass
    return 1


def _dice_kernel(x_ref, t_ref, o_ref, acc_ref, *,
                 rows, tm, chunk, gw, npc, need_mask):
    c = pl.program_id(0)          # TensorCore split (parallel axis)
    i = pl.program_id(1)          # row-block stream (reduction axis)

    @pl.when(i == 0)
    def _():
        acc_ref[...] = jnp.zeros_like(acc_ref)

    nchunks = tm // chunk
    g = chunk // gw
    lanes = x_ref.shape[1]
    row0 = (c * npc + i) * tm     # un-clamped global start row of this block

    def do_chunk(off, masked):
        x = x_ref[pl.ds(off, chunk), :].astype(jnp.float32)
        t = t_ref[pl.ds(off, chunk), :].astype(jnp.float32)
        if masked:   # static: only emitted on the pl.when(ragged) path
            r = jax.lax.broadcasted_iota(jnp.int32, (chunk, lanes), 0)
            valid = (r + (row0 + off)) < rows
            x = jnp.where(valid, x, 0.0)
            t = jnp.where(valid, t, 0.0)
        # Sublane-group partial sums: tile-preserving reshape + pure vreg-wise
        # VPU adds (no XLU, no scalar chain) into the resident accumulator.
        acc_ref[0] += (x * t).reshape(g, gw, lanes).sum(axis=0)
        acc_ref[1] += x.reshape(g, gw, lanes).sum(axis=0)
        acc_ref[2] += t.reshape(g, gw, lanes).sum(axis=0)

    def accumulate(masked):
        if nchunks == 1:
            do_chunk(0, masked)
        else:
            def body(ci, carry):
                do_chunk(pl.multiple_of(ci * chunk, chunk), masked)
                return carry
            jax.lax.fori_loop(0, nchunks, body, 0)

    if need_mask:
        # Only tail blocks (ragged last block / clamped duplicate) pay for the
        # mask; every other block takes the fast unmasked path.
        ragged = row0 + tm > rows

        @pl.when(jnp.logical_not(ragged))
        def _():
            accumulate(False)

        @pl.when(ragged)
        def _():
            accumulate(True)
    else:
        accumulate(False)

    @pl.when(i == pl.num_programs(1) - 1)
    def _():
        o_ref[0] = acc_ref[...]


def _dice_partial_sums(x2, t2):
    """(rows, 128) native-dtype slabs -> (3,) f32: [sum(x*t), sum(x), sum(t)]."""
    rows, lanes = x2.shape
    item_bytes = x2.dtype.itemsize + t2.dtype.itemsize
    row_bytes = lanes * item_bytes

    if rows >= _CHUNK:
        chunk = _CHUNK
        tm_target = max(chunk, (_TARGET_STEP_BYTES // row_bytes) // chunk * chunk)
        tm = min(tm_target, (rows // chunk) * chunk)   # multiple of chunk, <= rows
    else:
        chunk = (rows // 8) * 8                        # caller guarantees rows >= 8
        tm = chunk
    gw = 32 if chunk % 32 == 0 else 8                  # accumulator group width

    nblocks = -(-rows // tm)
    ncores = max(1, min(_num_tensorcores(), nblocks))
    npc = -(-nblocks // ncores)                        # row blocks per core
    need_mask = (ncores * npc * tm != rows)

    def in_map(c, i):
        # Clamp so a duplicated tail block never DMAs outside the array; its
        # contribution is masked to zero inside the kernel (row0 >= rows).
        return (jnp.minimum(c * npc + i, nblocks - 1), 0)

    # 2x double-buffered native-dtype inputs + chunk-scale f32 intermediates
    # + slack; clamp to [32 MiB, 56 MiB] (<= physical VMEM on v5e/v6e/v7x).
    vmem_limit = 2 * tm * row_bytes + 8 * chunk * lanes * 4 + (4 << 20)
    vmem_limit = int(min(56 << 20, max(32 << 20, vmem_limit)))

    n_elems = rows * lanes
    cost = pl.CostEstimate(
        flops=4 * n_elems,
        transcendentals=0,
        bytes_accessed=n_elems * item_bytes + ncores * 3 * gw * lanes * 4,
    )

    out = pl.pallas_call(
        partial(_dice_kernel, rows=rows, tm=tm, chunk=chunk, gw=gw,
                npc=npc, need_mask=need_mask),
        out_shape=jax.ShapeDtypeStruct((ncores, 3, gw, lanes), jnp.float32),
        grid_spec=pltpu.PrefetchScalarGridSpec(
            num_scalar_prefetch=0,
            grid=(ncores, npc),
            in_specs=[
                pl.BlockSpec((tm, lanes), in_map),
                pl.BlockSpec((tm, lanes), in_map),
            ],
            out_specs=pl.BlockSpec((1, 3, gw, lanes), lambda c, i: (c, 0, 0, 0)),
            scratch_shapes=[pltpu.VMEM((3, gw, lanes), jnp.float32)],
        ),
        compiler_params=pltpu.CompilerParams(
            # NOTE: on v7x, if xprof shows only one TensorCore busy, switch the
            # leading axis to pltpu.CORE_PARALLEL.
            dimension_semantics=("parallel", "arbitrary"),
            vmem_limit_bytes=vmem_limit,
        ),
        cost_estimate=cost,
    )(x2, t2)

    # Tiny final combine: one cross-lane reduce over (ncores, 3, gw, 128).
    return jnp.sum(out, axis=(0, 2, 3))


def _jnp_sums(x, t):
    xf = x.astype(jnp.float32)
    tf = t.astype(jnp.float32)
    return jnp.stack([jnp.sum(xf * tf), jnp.sum(xf), jnp.sum(tf)])


def dice_pallas(inputs, targets, smooth=1.0):
    x = jnp.ravel(inputs)   # native dtype; cast to f32 inside the kernel
    t = jnp.ravel(targets)
    assert x.shape == t.shape, "inputs and targets must have the same number of elements"
    n = x.shape[0]
    rows = n // _LANES

    if rows < 8:
        # Too small for a lane-dense slab; the whole reduction fits in a few vregs.
        sums = _jnp_sums(x, t)
    else:
        n_main = rows * _LANES
        if n_main != n:
            # Non-128-aligned tail (< 128 elements): sum it in the wrapper
            # instead of padding/copying both full tensors.
            # TODO(synk): XLA still materializes x[:n_main] as a copy here; a
            # fully copy-free ragged path would need a manual-DMA 1-D kernel.
            sums_tail = _jnp_sums(x[n_main:], t[n_main:])
            x_main, t_main = x[:n_main], t[:n_main]
        else:
            sums_tail = jnp.zeros((3,), jnp.float32)
            x_main, t_main = x, t
        sums = _dice_partial_sums(x_main.reshape(rows, _LANES),
                                  t_main.reshape(rows, _LANES)) + sums_tail

    smooth = jnp.float32(smooth)
    return (2.0 * sums[0] + smooth) / (sums[1] + sums[2] + smooth)


if __name__ == "__main__":
    key = jax.random.PRNGKey(0)
    k1, k2 = jax.random.split(key)
    # Small segmentation-like shapes: NCHW = (2, 4, 16, 16)
    inputs = jax.nn.sigmoid(jax.random.normal(k1, (2, 4, 16, 16), jnp.float32))
    targets = (jax.random.uniform(k2, (2, 4, 16, 16)) > 0.5).astype(jnp.float32)

    dice = dice_pallas(inputs, targets, smooth=1.0)
    dice = jax.block_until_ready(dice)

    # Pure-JAX reference check.
    inter = jnp.sum(inputs * targets)
    ref = (2.0 * inter + 1.0) / (jnp.sum(inputs) + jnp.sum(targets) + 1.0)
    assert jnp.allclose(dice, ref, rtol=1e-5, atol=1e-6), (dice, ref)

    print("KERNEL_OK")
</pallas_src>

<mosaic_0001>
module attributes {stable_mosaic.version = 11 : i64} {
  func.func @_dice_kernel(%arg0: i32, %arg1: i32, %arg2: memref<16x128xf32, #tpu.memory_space<vmem>>, %arg3: memref<16x128xf32, #tpu.memory_space<vmem>>, %arg4: memref<1x3x8x128xf32, #tpu.memory_space<vmem>>, %arg5: memref<3x8x128xf32, #tpu.memory_space<vmem>>) attributes {dimension_semantics = [#tpu.dimension_semantics<parallel>, #tpu.dimension_semantics<arbitrary>], iteration_bounds = array<i64: 1, 1>, scalar_prefetch = 0 : i64, scratch_operands = 1 : i64, tpu.core_type = #tpu.core_type<tc>, window_params = [{transform_indices = @transform_0, window_bounds = array<i64: 16, 128>}, {transform_indices = @transform_1, window_bounds = array<i64: 16, 128>}, {transform_indices = @transform_2, window_bounds = array<i64: 1, 3, 8, 128>}]} {
    %c0_i32 = arith.constant 0 : i32
    %0 = arith.cmpi eq, %arg1, %c0_i32 : i32
    %1 = arith.extui %0 : i1 to i32
    %c0_i32_0 = arith.constant 0 : i32
    %2 = arith.cmpi ne, %1, %c0_i32_0 : i32
    scf.if %2 {
      %cst_24 = arith.constant 0.000000e+00 : f32
      %33 = vector.broadcast %cst_24 : f32 to vector<3x8x128xf32>
      %c0_25 = arith.constant 0 : index
      %c0_26 = arith.constant 0 : index
      %c0_27 = arith.constant 0 : index
      %34 = vector.load %arg5[%c0_25, %c0_26, %c0_27] : memref<3x8x128xf32, #tpu.memory_space<vmem>>, vector<3x8x128xf32>
      tpu.vector_store %arg5[%c0_25, %c0_26, %c0_27], %33 {strides = array<i32>} : memref<3x8x128xf32, #tpu.memory_space<vmem>>, vector<3x8x128xf32>,
    } else {
    }
    %c0 = arith.constant 0 : index
    %c0_1 = arith.constant 0 : index
    %3 = vector.load %arg2[%c0, %c0_1] : memref<16x128xf32, #tpu.memory_space<vmem>>, vector<16x128xf32>
    %c0_2 = arith.constant 0 : index
    %c0_3 = arith.constant 0 : index
    %4 = vector.load %arg3[%c0_2, %c0_3] : memref<16x128xf32, #tpu.memory_space<vmem>>, vector<16x128xf32>
    %c0_4 = arith.constant 0 : index
    %c0_5 = arith.constant 0 : index
    %c0_6 = arith.constant 0 : index
    %5 = vector.load %arg5[%c0_4, %c0_5, %c0_6] : memref<3x8x128xf32, #tpu.memory_space<vmem>>, vector<1x8x128xf32>
    %6 = vector.shape_cast %5 : vector<1x8x128xf32> to vector<8x128xf32>
    %7 = arith.mulf %3, %4 : vector<16x128xf32>
    %8 = vector.shape_cast %7 : vector<16x128xf32> to vector<2x8x128xf32>
    %cst = arith.constant dense<0.000000e+00> : vector<8x128xf32>
    %9 = vector.multi_reduction <add>, %8, %cst [0] : vector<2x8x128xf32> to vector<8x128xf32>
    %10 = arith.addf %6, %9 : vector<8x128xf32>
    %c0_7 = arith.constant 0 : index
    %c0_8 = arith.constant 0 : index
    %c0_9 = arith.constant 0 : index
    %11 = vector.load %arg5[%c0_7, %c0_8, %c0_9] : memref<3x8x128xf32, #tpu.memory_space<vmem>>, vector<1x8x128xf32>
    %12 = vector.shape_cast %11 : vector<1x8x128xf32> to vector<8x128xf32>
    %13 = vector.shape_cast %10 : vector<8x128xf32> to vector<1x8x128xf32>
    tpu.vector_store %arg5[%c0_7, %c0_8, %c0_9], %13 {strides = array<i32>} : memref<3x8x128xf32, #tpu.memory_space<vmem>>, vector<1x8x128xf32>,
    %c1 = arith.constant 1 : index
    %c0_10 = arith.constant 0 : index
    %c0_11 = arith.constant 0 : index
    %14 = vector.load %arg5[%c1, %c0_10, %c0_11] : memref<3x8x128xf32, #tpu.memory_space<vmem>>, vector<1x8x128xf32>
    %15 = vector.shape_cast %14 : vector<1x8x128xf32> to vector<8x128xf32>
    %16 = vector.shape_cast %3 : vector<16x128xf32> to vector<2x8x128xf32>
    %cst_12 = arith.constant dense<0.000000e+00> : vector<8x128xf32>
    %17 = vector.multi_reduction <add>, %16, %cst_12 [0] : vector<2x8x128xf32> to vector<8x128xf32>
    %18 = arith.addf %15, %17 : vector<8x128xf32>
    %c1_13 = arith.constant 1 : index
    %c0_14 = arith.constant 0 : index
    %c0_15 = arith.constant 0 : index
    %19 = vector.load %arg5[%c1_13, %c0_14, %c0_15] : memref<3x8x128xf32, #tpu.memory_space<vmem>>, vector<1x8x128xf32>
    %20 = vector.shape_cast %19 : vector<1x8x128xf32> to vector<8x128xf32>
    %21 = vector.shape_cast %18 : vector<8x128xf32> to vector<1x8x128xf32>
    tpu.vector_store %arg5[%c1_13, %c0_14, %c0_15], %21 {strides = array<i32>} : memref<3x8x128xf32, #tpu.memory_space<vmem>>, vector<1x8x128xf32>,
    %c2 = arith.constant 2 : index
    %c0_16 = arith.constant 0 : index
    %c0_17 = arith.constant 0 : index
    %22 = vector.load %arg5[%c2, %c0_16, %c0_17] : memref<3x8x128xf32, #tpu.memory_space<vmem>>, vector<1x8x128xf32>
    %23 = vector.shape_cast %22 : vector<1x8x128xf32> to vector<8x128xf32>
    %24 = vector.shape_cast %4 : vector<16x128xf32> to vector<2x8x128xf32>
    %cst_18 = arith.constant dense<0.000000e+00> : vector<8x128xf32>
    %25 = vector.multi_reduction <add>, %24, %cst_18 [0] : vector<2x8x128xf32> to vector<8x128xf32>
    %26 = arith.addf %23, %25 : vector<8x128xf32>
    %c2_19 = arith.constant 2 : index
    %c0_20 = arith.constant 0 : index
    %c0_21 = arith.constant 0 : index
    %27 = vector.load %arg5[%c2_19, %c0_20, %c0_21] : memref<3x8x128xf32, #tpu.memory_space<vmem>>, vector<1x8x128xf32>
    %28 = vector.shape_cast %27 : vector<1x8x128xf32> to vector<8x128xf32>
    %29 = vector.shape_cast %26 : vector<8x128xf32> to vector<1x8x128xf32>
    tpu.vector_store %arg5[%c2_19, %c0_20, %c0_21], %29 {strides = array<i32>} : memref<3x8x128xf32, #tpu.memory_space<vmem>>, vector<1x8x128xf32>,
    %c0_i32_22 = arith.constant 0 : i32
    %30 = arith.cmpi eq, %arg1, %c0_i32_22 : i32
    %31 = arith.extui %30 : i1 to i32
    %c0_i32_23 = arith.constant 0 : i32
    %32 = arith.cmpi ne, %31, %c0_i32_23 : i32
    scf.if %32 {
      %c0_24 = arith.constant 0 : index
      %c0_25 = arith.constant 0 : index
      %c0_26 = arith.constant 0 : index
      %33 = vector.load %arg5[%c0_24, %c0_25, %c0_26] : memref<3x8x128xf32, #tpu.memory_space<vmem>>, vector<3x8x128xf32>
      %c0_27 = arith.constant 0 : index
      %c0_28 = arith.constant 0 : index
      %c0_29 = arith.constant 0 : index
      %c0_30 = arith.constant 0 : index
      %34 = vector.load %arg4[%c0_27, %c0_28, %c0_29, %c0_30] : memref<1x3x8x128xf32, #tpu.memory_space<vmem>>, vector<1x3x8x128xf32>
      %35 = vector.shape_cast %34 : vector<1x3x8x128xf32> to vector<3x8x128xf32>
      %36 = vector.shape_cast %33 : vector<3x8x128xf32> to vector<1x3x8x128xf32>
      tpu.vector_store %arg4[%c0_27, %c0_28, %c0_29, %c0_30], %36 {strides = array<i32>} : memref<1x3x8x128xf32, #tpu.memory_space<vmem>>, vector<1x3x8x128xf32>,
    } else {
    }
    return
  }
  func.func @transform_0(%arg0: i32, %arg1: i32) -> (i32, i32) {
    %c1_i32 = arith.constant 1 : i32
    %0 = arith.muli %arg0, %c1_i32 : i32
    %1 = arith.addi %0, %arg1 : i32
    %c0_i32 = arith.constant 0 : i32
    %2 = arith.minsi %1, %c0_i32 : i32
    %c0_i32_0 = arith.constant 0 : i32
    %c0_i32_1 = arith.constant 0 : i32
    return %2, %c0_i32_0 : i32, i32
  }
  func.func @transform_1(%arg0: i32, %arg1: i32) -> (i32, i32) {
    %c1_i32 = arith.constant 1 : i32
    %0 = arith.muli %arg0, %c1_i32 : i32
    %1 = arith.addi %0, %arg1 : i32
    %c0_i32 = arith.constant 0 : i32
    %2 = arith.minsi %1, %c0_i32 : i32
    %c0_i32_0 = arith.constant 0 : i32
    %c0_i32_1 = arith.constant 0 : i32
    return %2, %c0_i32_0 : i32, i32
  }
  func.func @transform_2(%arg0: i32, %arg1: i32) -> (i32, i32, i32, i32) {
    %c0_i32 = arith.constant 0 : i32
    %c0_i32_0 = arith.constant 0 : i32
    %c0_i32_1 = arith.constant 0 : i32
    %c0_i32_2 = arith.constant 0 : i32
    return %arg0, %c0_i32, %c0_i32_0, %c0_i32_1 : i32, i32, i32, i32
  }
}

</mosaic_0001>

<llo_original>
// kernel: tpu_custom_call.1
$region0: #{tpu_custom_call.1}
  #allocation0 [shape = 'u32[]', space=smem, size = 0x4, offset = 0x4, fixed_abs, tag = 'smem constant byte address 0x4 - core index']
  #allocation1 [shape = 'u32[144,128]{1,0:T(1,128)}', space=vmem, size = 0x12000, scoped, tag = 'internal scratch']
  #allocation2 [shape = 'f32[3,8,128]{2,1,0:T(8,128)}', space=vmem, size = 0x3000, scoped, tag = 'scratch operand']
  %s0 = inlined_call_operand.hbm [shape: f32[16,128], index: 0, kind: input, shape index: {}]
  %s1 = inlined_call_operand.hbm [shape: f32[16,128], index: 1, kind: input, shape index: {}]
  %s2 = inlined_call_operand.hbm [shape: f32[1,3,8,128], index: 2, kind: output, shape index: {}]
  %s3 = sld [smem:[#allocation0]]
  $region34: #{tpu_custom_call.1} parent=0
    _
  %s5 = ssub.s32 1, %s3
  %s6 = scalar_select 0, %s5, %s3
  $region1: #{tpu_custom_call.1} parent=0
    #allocation3 [shape = 'u8[8192]{0}', space=vmem, size = 0x2000, scoped, tag = 'input window, operand 0, single buffered']
    #allocation4 [shape = 's32[1]{0}', space=sflag, size = 0x4, scoped, tag = 'scoped memory for tpu_custom_call.1']
    #allocation5 [shape = 's32[1]{0}', space=sflag, size = 0x4, scoped, tag = 'scoped memory for tpu_custom_call.1']
    #allocation6 [shape = 'u8[8192]{0}', space=vmem, size = 0x2000, scoped, tag = 'input window, operand 1, single buffered']
    #allocation7 [shape = 's32[1]{0}', space=sflag, size = 0x4, scoped, tag = 'scoped memory for tpu_custom_call.1']
    #allocation8 [shape = 'u8[12288]{0}', space=vmem, size = 0x3000, scoped, tag = 'output window, operand 0, single buffered']
    %7 = vsyncpa [#allocation4], 0
    %8 = vsyncpa [#allocation7], 0
    %9 = vsyncpa [#allocation5], 0
    // Predicated region
    $region2: #{tpu_custom_call.1} parent=1 // pred_check
      _
    $region3: #{tpu_custom_call.1} parent=1 // pred_check_branch
      %11 = sbr.rel (0) target = $region5
    $region4: #{tpu_custom_call.1} parent=1 // pred_region
      %s12 = sadd.s32 0, 0
      %p13 = scmp.lt.s32.totalorder %s12, 0
      %s14 = scalar_select %p13, %s12, 0
      %s15 = smul.u32 2, %s14
      %s17 = ssub.s32 256, 256
      %18 = vsyncadd [#allocation4], %s17
      %s19 = smul.addr %s15, 128
      %s20 = scalar_lea.hbm %s0, %s19
      %s21 = sshll.u32 [#allocation3], 4
      %s22 = int_to_ptr.vmem [resolvable:$true] %s21
      %27 = dma.hbm_to_vmem [thread:$0]  %s20, 256, %s22, [#allocation4], 128, 128, 8
    $region5: #{tpu_custom_call.1} parent=1 // pred_fallthru
      _
    // Predicated region
    $region6: #{tpu_custom_call.1} parent=1 // pred_check
      _
    $region7: #{tpu_custom_call.1} parent=1 // pred_check_branch
      %29 = sbr.rel (0) target = $region9
    $region8: #{tpu_custom_call.1} parent=1 // pred_region
      %s30 = sadd.s32 0, 0
      %p31 = scmp.lt.s32.totalorder %s30, 0
      %s32 = scalar_select %p31, %s30, 0
      %s33 = smul.u32 2, %s32
      %s35 = ssub.s32 256, 256
      %36 = vsyncadd [#allocation7], %s35
      %s37 = smul.addr %s33, 128
      %s38 = scalar_lea.hbm %s1, %s37
      %s39 = sshll.u32 [#allocation6], 4
      %s40 = int_to_ptr.vmem [resolvable:$true] %s39
      %45 = dma.hbm_to_vmem [thread:$0]  %s38, 256, %s40, [#allocation7], 128, 128, 8
    $region9: #{tpu_custom_call.1} parent=1 // pred_fallthru
      _
    // Predicated region
    $region10: #{tpu_custom_call.1} parent=1 // pred_check
      _
    $region11: #{tpu_custom_call.1} parent=1 // pred_check_branch
      %47 = sbr.rel (0) target = $region13
    $region12: #{tpu_custom_call.1} parent=1 // pred_region
      %48 = dma.done [#allocation4], 256
    $region13: #{tpu_custom_call.1} parent=1 // pred_fallthru
      _
    // Predicated region
    $region14: #{tpu_custom_call.1} parent=1 // pred_check
      _
    $region15: #{tpu_custom_call.1} parent=1 // pred_check_branch
      %50 = sbr.rel (0) target = $region17
    $region16: #{tpu_custom_call.1} parent=1 // pred_region
      %51 = dma.done [#allocation7], 256
    $region17: #{tpu_custom_call.1} parent=1 // pred_fallthru
      _
    %s52 = sadd.s32 0, 0
    %p53 = scmp.lt.s32.totalorder %s52, 0
    %s54 = scalar_select %p53, %s52, 0
    %s55 = smul.u32 2, %s54
    %s56 = sadd.s32 0, 0
    %p57 = scmp.lt.s32.totalorder %s56, 0
    %s58 = scalar_select %p57, %s56, 0
    %s59 = smul.u32 2, %s58
    %p60 = scmp.eq.s32.totalorder 0, 0
    // Predicated region
    $region18: #{tpu_custom_call.1} parent=1 // pred_check
      %p61 = pneg %p60
    $region19: #{tpu_custom_call.1} parent=1 // pred_check_branch
      %63 = sbr.rel (%p61) target = $region21
    $region20: #{tpu_custom_call.1} parent=1 // pred_region
      %64 = vst [vmem:[#allocation2] sm:$0xff] 0.0
      %65 = vst [vmem:[#allocation2 + $0x8] sm:$0xff] 0.0
      %66 = vst [vmem:[#allocation2 + $0x10] sm:$0xff] 0.0
    $region21: #{tpu_custom_call.1} parent=1 // pred_fallthru
      _
    %v67 = vld [vmem:[#allocation3] sm:$0xff]
    %v68 = vld [vmem:[#allocation3 + $0x8] sm:$0xff]
    %v69 = vld [vmem:[#allocation6] sm:$0xff]
    %v70 = vld [vmem:[#allocation6 + $0x8] sm:$0xff]
    %v71 = vld [vmem:[#allocation2] sm:$0xff]
    %v72 = vmul.f32 %v67, %v69
    %v73 = vmul.f32 %v68, %v70
    %v74 = vadd.f32 %v72, %v73
    %v75 = vadd.f32 %v71, %v74
    %76 = vst [vmem:[#allocation2] sm:$0xff] %v75
    %s77 = scalar_lea.vmem [#allocation2], 8
    %v78 = vld [vmem:[%s77] sm:$0xff]
    %v79 = vadd.f32 %v67, %v68
    %v80 = vadd.f32 %v78, %v79
    %81 = vst [vmem:[%s77] sm:$0xff] %v80
    %s82 = scalar_lea.vmem [#allocation2], 16
    %v83 = vld [vmem:[%s82] sm:$0xff]
    %v84 = vadd.f32 %v69, %v70
    %v85 = vadd.f32 %v83, %v84
    %86 = vst [vmem:[%s82] sm:$0xff] %v85
    // Predicated region
    $region22: #{tpu_custom_call.1} parent=1 // pred_check
      %p87 = pneg %p60
    $region23: #{tpu_custom_call.1} parent=1 // pred_check_branch
      %89 = sbr.rel (%p87) target = $region25
    $region24: #{tpu_custom_call.1} parent=1 // pred_region
      %v90 = vld [vmem:[#allocation2] sm:$0xff]
      %v91 = vld [vmem:[#allocation2 + $0x8] sm:$0xff]
      %v92 = vld [vmem:[#allocation2 + $0x10] sm:$0xff]
      %93 = vst [vmem:[#allocation8] sm:$0xff] %v90
      %94 = vst [vmem:[#allocation8 + $0x8] sm:$0xff] %v91
      %95 = vst [vmem:[#allocation8 + $0x10] sm:$0xff] %v92
    $region25: #{tpu_custom_call.1} parent=1 // pred_fallthru
      _
    // Predicated region
    $region26: #{tpu_custom_call.1} parent=1 // pred_check
      _
    $region27: #{tpu_custom_call.1} parent=1 // pred_check_branch
      %97 = sbr.rel (0) target = $region29
    $region28: #{tpu_custom_call.1} parent=1 // pred_region
      %s99 = ssub.s32 384, 384
      %100 = vsyncadd [#allocation5], %s99
      %s101 = sshll.u32 [#allocation8], 4
      %s102 = int_to_ptr.vmem [resolvable:$true] %s101
      %107 = dma.vmem_to_hbm [thread:$0]  %s102, 384, %s2, [#allocation5], 128, 128, 8
    $region29: #{tpu_custom_call.1} parent=1 // pred_fallthru
      _
    // Predicated region
    $region30: #{tpu_custom_call.1} parent=1 // pred_check
      _
    $region31: #{tpu_custom_call.1} parent=1 // pred_check_branch
      %109 = sbr.rel (0) target = $region33
    $region32: #{tpu_custom_call.1} parent=1 // pred_region
      %110 = dma.done [#allocation5], 384
    $region33: #{tpu_custom_call.1} parent=1 // pred_fallthru
      _
    %111 = vsyncpa [#allocation4], 1
    %112 = vsyncpa [#allocation7], 1
    %113 = vsyncpa [#allocation5], 1

</llo_original>
